<compile_context>
chip_gen: v7x
topology: tpu7x:2x2x1
jax: 0.10.0
libtpu: 0.0.40
codegen_flags: <defaults>
</compile_context>

<pallas_src>
import numpy as np
import jax
import jax.numpy as jnp
from jax.experimental import pallas as pl
from jax.experimental.pallas import tpu as pltpu

# ----------------------- config (small, consistent with the module) ----------
ASM_STR_SRC = "ida_asm_strs"
ASM_CONST_SRC = ASM_STR_SRC.split("_")[0] + "_asm_consts"   # "ida_asm_consts"
OUT_TYPE = "const_emb:add"

BATCH = 4          # kept >= MAX_NUM_STR because the original code indexes the batch
MAX_NUM_STR = 4    # dim of fn_token_es with arange(max_num_str) ("b_idx")
MAX_LEN_STR = 8    # str_embed_kwargs['max_num_token']
VOCAB = 256        # num_embeddings (ASCII)
DIM = 128          # embedding_dim (lane-sized for the small demo)
SEQ = 16           # fn_token_es sequence length


# ----------------------- host-side string preprocessing (pure Python) --------
def preprocess_str(strs, max_len):
    str_ids = []
    if isinstance(strs[0], (list, tuple)):
        masks = []
        for s in strs:
            s_ids, s_masks = preprocess_str(s, max_len)
            str_ids.append(s_ids)
            masks.append(s_masks)
    else:
        empty_len = [0] * max_len
        masks = np.zeros((len(strs), max_len))
        for i, s in enumerate(strs):
            ord_ids = [ord(e) for e in s[::-1]]
            str_ids.append((ord_ids + empty_len)[:max_len])
            masks[i, : len(ord_ids)] = 1
    return str_ids, masks


def preprocess_strs(infos, asm_const_src, max_num_str):
    info_const_data = [info[asm_const_src] for info in infos]
    max_empty_data = [("\x00", 0, 0)] * max_num_str
    masks = np.zeros((len(info_const_data), max_num_str))
    for i, ds in enumerate(info_const_data):
        masks[i, : len(ds)] = 1
    info_const_data_pad = [(ds + max_empty_data)[:max_num_str] for ds in info_const_data]
    const_str = [[str(d[0]) for d in ds] for ds in info_const_data_pad]
    const_pos = [[d[1] for d in ds] for ds in info_const_data_pad]
    return const_str, const_pos, masks


def preprocess(infos):
    const_strs, const_pos, masks = preprocess_strs(infos, ASM_CONST_SRC, MAX_NUM_STR)
    str_ids, _ = preprocess_str(const_strs, MAX_LEN_STR)
    str_ids = jnp.asarray(np.array(str_ids), dtype=jnp.int32)        # (b, S, L)
    const_pos = jnp.asarray(np.array(const_pos), dtype=jnp.int32)    # (b, S)
    # masks are computed and discarded downstream, exactly as in the torch module
    masks = jnp.asarray(masks, dtype=jnp.float32)
    return str_ids, const_pos, masks


# ----------------------- the single fused Pallas kernel -----------------------
def const_block_kernel(idx_ref, tab_ref, posm_ref, fn_flat_ref, w_ref, b_ref,
                       fne_ref, out_ref):
    """idx_ref     : (B*S, L+2) int32   — [:, :L] ASCII ids, [:, L] left idx, [:, L+1] right idx
       tab_ref     : (V, D)     bf16    — char embedding table
       posm_ref    : (1, D)     f32     — precomputed mean of the positional table
       fn_flat_ref : (S*T, D)   bf16    — fn_token_es[:S] flattened over (string, token)
       w_ref       : (D, D)     bf16    — head weight, pre-scaled by 1/(3*S)
       b_ref       : (1, D)     f32
       fne_ref     : (B, D)     f32
       out_ref     : (2*B, D)   f32     — rows 0..B-1 = fn_e + const_e, rows B..2B-1 = const_e"""
    N, Lp2 = idx_ref.shape
    L = Lp2 - 2
    V, D = tab_ref.shape
    ST = fn_flat_ref.shape[0]
    B = fne_ref.shape[0]
    S = N // B

    # 1) per-string ASCII count matrix: counts[n, v] = #{l : ids[n, l] == v}
    #    (sum over chars of one-hots; counts <= L are exact in bf16 -> bf16 MXU operand)
    lane_v = jax.lax.broadcasted_iota(jnp.int32, (N, V), 1)
    counts = (lane_v == idx_ref[:, 0:1]).astype(jnp.bfloat16)
    for l in range(1, L):                                   # static, unrolled (L = 8)
        counts = counts + (lane_v == idx_ref[:, l:l + 1]).astype(jnp.bfloat16)

    # 2) char-embedding mean: (counts @ table) / L + pos_mean  (mean is linear)
    tok_sum = jnp.dot(counts, tab_ref[...], preferred_element_type=jnp.float32)  # (N, D)
    cse = tok_sum * (1.0 / L) + posm_ref[...]

    # 3) neighbor gather as ONE bf16 one-hot matmul over the flattened (string, token) axis.
    #    sel[n, s*T + t] = [t == lp] + [t == rp]  (values 0/1/2 -> exact in bf16)
    lane_t = jax.lax.broadcasted_iota(jnp.int32, (N, ST), 1)
    lidx = idx_ref[:, L:L + 1]
    ridx = idx_ref[:, L + 1:L + 2]
    sel = ((lane_t == lidx).astype(jnp.bfloat16)
           + (lane_t == ridx).astype(jnp.bfloat16))                              # (N, ST)
    nb = jnp.dot(sel, fn_flat_ref[...], preferred_element_type=jnp.float32)      # (N, D)

    # 4) relu — the /3 and the 1/S string-mean are folded into W (relu(x)/3 == relu(x/3))
    fused = jnp.maximum(cse + nb, 0.0)                                           # (N, D)

    # 5) str_list_embedding stand-in: sum over strings (sublane reduce) + dense head on the
    #    MXU with the pre-scaled bf16 W, then 'const_emb:add'.
    pooled = jnp.sum(fused.reshape(B, S, D), axis=1).astype(jnp.bfloat16)        # (B, D)
    ce = jnp.dot(pooled, w_ref[...], preferred_element_type=jnp.float32) + b_ref[...]

    # packed output: one full (8,128) tile -> single unmasked writeback DMA
    out_ref[0:B, :] = fne_ref[...] + ce
    out_ref[B:2 * B, :] = ce


_VMEM = pl.BlockSpec(memory_space=pltpu.MemorySpace.VMEM)


# ----------------------- one-time parameter transform -------------------------
def prepare_params(params, max_num_str):
    """Done once at init time (not per call): bf16 casts, pos-table mean, scale folds."""
    return dict(
        tok_table=params["tok_table"].astype(jnp.bfloat16),                      # (V, D)
        pos_mean=params["pos_table"].mean(axis=0, keepdims=True),                # (1, D) f32
        W=(params["W"] / (3.0 * max_num_str)).astype(jnp.bfloat16),              # fold /3, 1/S
        bias=params["bias"],                                                     # (1, D) f32
    )


# ----------------------- wrapper (layout plumbing + pallas_call) --------------
def const_data_block_forward(fn_e, infos, fn_token_es, kparams):
    str_ids, const_pos, _masks = preprocess(infos)
    b, s, l = str_ids.shape
    t = fn_token_es.shape[1]
    v, d = kparams["tok_table"].shape
    # faithful to the torch `b_idx = arange(max_num_str)` quirk: neighbor rows come from
    # fn_token_es[string_index]; this silently requires batch >= max_num_str.
    assert fn_token_es.shape[0] >= s, "b_idx quirk requires batch >= max_num_str"

    # clip to t-1 (not t): the torch clamp(0, T) would allow index T; with the one-hot-matmul
    # gather an index of T would silently select nothing, so the clip is load-bearing (and
    # matches JAX's own OOB-clamping gather semantics).
    lp = jnp.clip(const_pos - 1, 0, t - 1).astype(jnp.int32)                      # (b, s)
    rp = jnp.clip(const_pos + 1, 0, t - 1).astype(jnp.int32)
    str_off = (jnp.arange(s, dtype=jnp.int32) * t)[None, :]                       # (1, s)
    lidx = (str_off + lp).reshape(b * s, 1)
    ridx = (str_off + rp).reshape(b * s, 1)
    # single merged int32 index input (one micro-DMA instead of three)
    idx = jnp.concatenate([str_ids.reshape(b * s, l), lidx, ridx], axis=1)        # (b*s, l+2)

    fn_flat = fn_token_es[:s].reshape(s * t, d).astype(jnp.bfloat16)              # (s*t, d)

    n, st = b * s, s * t
    flops = 2 * (n * v * d + n * st * d + b * d * d)
    bytes_accessed = (idx.size * 4 + v * d * 2 + d * 4 + st * d * 2
                      + d * d * 2 + d * 4 + b * d * 4 + 2 * b * d * 4)

    packed = pl.pallas_call(
        const_block_kernel,
        out_shape=jax.ShapeDtypeStruct((2 * b, d), jnp.float32),
        in_specs=[_VMEM] * 7,
        out_specs=_VMEM,
        cost_estimate=pl.CostEstimate(flops=flops, transcendentals=0,
                                      bytes_accessed=bytes_accessed),
    )(idx, kparams["tok_table"], kparams["pos_mean"], fn_flat,
      kparams["W"], kparams["bias"], fn_e)

    out, const_e = packed[:b], packed[b:]
    if OUT_TYPE == "const_emb":
        return fn_e, {"const_f": const_e}
    return out, {"const_f": const_e}                                              # 'const_emb:add'


# ----------------------- pure-JAX reference (original f32 params) -------------
def reference_forward(str_ids, const_pos, fn_e, fn_token_es, params):
    tok = params["tok_table"][str_ids] + params["pos_table"][None, None]          # (b,S,L,D)
    cse = tok.mean(axis=2)                                                        # (b,S,D)
    T = fn_token_es.shape[1]
    lp = jnp.clip(const_pos - 1, 0, T - 1)
    rp = jnp.clip(const_pos + 1, 0, T - 1)
    b_idx = jnp.arange(const_pos.shape[1])[None, :]
    nb = fn_token_es[b_idx, lp] + fn_token_es[b_idx, rp]
    cse = (cse + nb) / 3.0
    x = jnp.maximum(cse, 0.0)
    pooled = x.mean(axis=1)
    ce = pooled @ params["W"] + params["bias"][0]
    return fn_e + ce, ce


# ----------------------- main --------------------------------------------------
if __name__ == "__main__":
    key = jax.random.PRNGKey(0)
    k1, k2, k3, k4, k5, k6 = jax.random.split(key, 6)
    params = dict(
        tok_table=0.02 * jax.random.normal(k1, (VOCAB, DIM), jnp.float32),
        pos_table=0.02 * jax.random.normal(k2, (MAX_LEN_STR, DIM), jnp.float32),
        W=jax.random.normal(k3, (DIM, DIM), jnp.float32) / np.sqrt(DIM),
        bias=0.01 * jax.random.normal(k4, (1, DIM), jnp.float32),
    )
    fn_e = jax.random.normal(k5, (BATCH, DIM), jnp.float32)
    fn_token_es = jax.random.normal(k6, (BATCH, SEQ, DIM), jnp.float32)

    # deterministic synthetic `infos`: list of dicts with (const_str, position, size) tuples
    infos = []
    for i in range(BATCH):
        n_consts = (i % MAX_NUM_STR) + 1
        consts = [(str(1234 + 7 * i + 3 * k), 1 + ((i + 2 * k) % (SEQ - 2)), 4)
                  for k in range(n_consts)]
        infos.append({ASM_CONST_SRC: consts})

    kparams = prepare_params(params, MAX_NUM_STR)          # one-time transform
    out, aux = const_data_block_forward(fn_e, infos, fn_token_es, kparams)
    out = jax.block_until_ready(out)
    const_e = jax.block_until_ready(aux["const_f"])

    str_ids, const_pos, _ = preprocess(infos)
    ref_out, ref_ce = reference_forward(str_ids, const_pos, fn_e, fn_token_es, params)
    assert jnp.allclose(out, ref_out, atol=1e-2, rtol=1e-2)
    assert jnp.allclose(const_e, ref_ce, atol=1e-2, rtol=1e-2)

    print("KERNEL_OK")
</pallas_src>

<mosaic_0001>
module attributes {stable_mosaic.version = 11 : i64} {
  func.func @const_block_kernel(%arg0: memref<16x10xi32, #tpu.memory_space<vmem>>, %arg1: memref<256x128xbf16, #tpu.memory_space<vmem>>, %arg2: memref<1x128xf32, #tpu.memory_space<vmem>>, %arg3: memref<64x128xbf16, #tpu.memory_space<vmem>>, %arg4: memref<128x128xbf16, #tpu.memory_space<vmem>>, %arg5: memref<1x128xf32, #tpu.memory_space<vmem>>, %arg6: memref<4x128xf32, #tpu.memory_space<vmem>>, %arg7: memref<8x128xf32, #tpu.memory_space<vmem>>) attributes {dimension_semantics = [], scalar_prefetch = 0 : i64, scratch_operands = 0 : i64, tpu.core_type = #tpu.core_type<tc>} {
    %0 = tpu.iota {dimensions = array<i32: 1>} : vector<16x256xi32>
    %c0 = arith.constant 0 : index
    %c0_0 = arith.constant 0 : index
    %1 = vector.load %arg0[%c0, %c0_0] : memref<16x10xi32, #tpu.memory_space<vmem>>, vector<16x1xi32>
    %2 = vector.broadcast %1 : vector<16x1xi32> to vector<16x256xi32>
    %3 = arith.cmpi eq, %0, %2 : vector<16x256xi32>
    %4 = arith.extui %3 : vector<16x256xi1> to vector<16x256xi32>
    %5 = arith.sitofp %4 : vector<16x256xi32> to vector<16x256xf32>
    %6 = arith.truncf %5 : vector<16x256xf32> to vector<16x256xbf16>
    %c0_1 = arith.constant 0 : index
    %c1 = arith.constant 1 : index
    %7 = vector.load %arg0[%c0_1, %c1] : memref<16x10xi32, #tpu.memory_space<vmem>>, vector<16x1xi32>
    %8 = vector.broadcast %7 : vector<16x1xi32> to vector<16x256xi32>
    %9 = arith.cmpi eq, %0, %8 : vector<16x256xi32>
    %10 = arith.extui %9 : vector<16x256xi1> to vector<16x256xi32>
    %11 = arith.sitofp %10 : vector<16x256xi32> to vector<16x256xf32>
    %12 = arith.truncf %11 : vector<16x256xf32> to vector<16x256xbf16>
    %13 = arith.addf %6, %12 : vector<16x256xbf16>
    %c0_2 = arith.constant 0 : index
    %c2 = arith.constant 2 : index
    %14 = vector.load %arg0[%c0_2, %c2] : memref<16x10xi32, #tpu.memory_space<vmem>>, vector<16x1xi32>
    %15 = vector.broadcast %14 : vector<16x1xi32> to vector<16x256xi32>
    %16 = arith.cmpi eq, %0, %15 : vector<16x256xi32>
    %17 = arith.extui %16 : vector<16x256xi1> to vector<16x256xi32>
    %18 = arith.sitofp %17 : vector<16x256xi32> to vector<16x256xf32>
    %19 = arith.truncf %18 : vector<16x256xf32> to vector<16x256xbf16>
    %20 = arith.addf %13, %19 : vector<16x256xbf16>
    %c0_3 = arith.constant 0 : index
    %c3 = arith.constant 3 : index
    %21 = vector.load %arg0[%c0_3, %c3] : memref<16x10xi32, #tpu.memory_space<vmem>>, vector<16x1xi32>
    %22 = vector.broadcast %21 : vector<16x1xi32> to vector<16x256xi32>
    %23 = arith.cmpi eq, %0, %22 : vector<16x256xi32>
    %24 = arith.extui %23 : vector<16x256xi1> to vector<16x256xi32>
    %25 = arith.sitofp %24 : vector<16x256xi32> to vector<16x256xf32>
    %26 = arith.truncf %25 : vector<16x256xf32> to vector<16x256xbf16>
    %27 = arith.addf %20, %26 : vector<16x256xbf16>
    %c0_4 = arith.constant 0 : index
    %c4 = arith.constant 4 : index
    %28 = vector.load %arg0[%c0_4, %c4] : memref<16x10xi32, #tpu.memory_space<vmem>>, vector<16x1xi32>
    %29 = vector.broadcast %28 : vector<16x1xi32> to vector<16x256xi32>
    %30 = arith.cmpi eq, %0, %29 : vector<16x256xi32>
    %31 = arith.extui %30 : vector<16x256xi1> to vector<16x256xi32>
    %32 = arith.sitofp %31 : vector<16x256xi32> to vector<16x256xf32>
    %33 = arith.truncf %32 : vector<16x256xf32> to vector<16x256xbf16>
    %34 = arith.addf %27, %33 : vector<16x256xbf16>
    %c0_5 = arith.constant 0 : index
    %c5 = arith.constant 5 : index
    %35 = vector.load %arg0[%c0_5, %c5] : memref<16x10xi32, #tpu.memory_space<vmem>>, vector<16x1xi32>
    %36 = vector.broadcast %35 : vector<16x1xi32> to vector<16x256xi32>
    %37 = arith.cmpi eq, %0, %36 : vector<16x256xi32>
    %38 = arith.extui %37 : vector<16x256xi1> to vector<16x256xi32>
    %39 = arith.sitofp %38 : vector<16x256xi32> to vector<16x256xf32>
    %40 = arith.truncf %39 : vector<16x256xf32> to vector<16x256xbf16>
    %41 = arith.addf %34, %40 : vector<16x256xbf16>
    %c0_6 = arith.constant 0 : index
    %c6 = arith.constant 6 : index
    %42 = vector.load %arg0[%c0_6, %c6] : memref<16x10xi32, #tpu.memory_space<vmem>>, vector<16x1xi32>
    %43 = vector.broadcast %42 : vector<16x1xi32> to vector<16x256xi32>
    %44 = arith.cmpi eq, %0, %43 : vector<16x256xi32>
    %45 = arith.extui %44 : vector<16x256xi1> to vector<16x256xi32>
    %46 = arith.sitofp %45 : vector<16x256xi32> to vector<16x256xf32>
    %47 = arith.truncf %46 : vector<16x256xf32> to vector<16x256xbf16>
    %48 = arith.addf %41, %47 : vector<16x256xbf16>
    %c0_7 = arith.constant 0 : index
    %c7 = arith.constant 7 : index
    %49 = vector.load %arg0[%c0_7, %c7] : memref<16x10xi32, #tpu.memory_space<vmem>>, vector<16x1xi32>
    %50 = vector.broadcast %49 : vector<16x1xi32> to vector<16x256xi32>
    %51 = arith.cmpi eq, %0, %50 : vector<16x256xi32>
    %52 = arith.extui %51 : vector<16x256xi1> to vector<16x256xi32>
    %53 = arith.sitofp %52 : vector<16x256xi32> to vector<16x256xf32>
    %54 = arith.truncf %53 : vector<16x256xf32> to vector<16x256xbf16>
    %55 = arith.addf %48, %54 : vector<16x256xbf16>
    %c0_8 = arith.constant 0 : index
    %c0_9 = arith.constant 0 : index
    %56 = vector.load %arg1[%c0_8, %c0_9] : memref<256x128xbf16, #tpu.memory_space<vmem>>, vector<256x128xbf16>
    %cst = arith.constant dense<0.000000e+00> : vector<16x128xf32>
    %57 = tpu.matmul %55, %56, %cst {dimension_numbers = #tpu.dot_dimension_numbers<[1], [0], [0], [1], [0, 0, 1, 1], [], []>} : vector<16x256xbf16>, vector<256x128xbf16>, vector<16x128xf32> -> vector<16x128xf32>
    %cst_10 = arith.constant 1.250000e-01 : f32
    %58 = vector.broadcast %cst_10 : f32 to vector<16x128xf32>
    %59 = arith.mulf %57, %58 : vector<16x128xf32>
    %c0_11 = arith.constant 0 : index
    %c0_12 = arith.constant 0 : index
    %60 = vector.load %arg2[%c0_11, %c0_12] : memref<1x128xf32, #tpu.memory_space<vmem>>, vector<1x128xf32>
    %61 = vector.broadcast %60 : vector<1x128xf32> to vector<16x128xf32>
    %62 = arith.addf %59, %61 : vector<16x128xf32>
    %63 = tpu.iota {dimensions = array<i32: 1>} : vector<16x64xi32>
    %c0_13 = arith.constant 0 : index
    %c8 = arith.constant 8 : index
    %64 = vector.load %arg0[%c0_13, %c8] : memref<16x10xi32, #tpu.memory_space<vmem>>, vector<16x1xi32>
    %c0_14 = arith.constant 0 : index
    %c9 = arith.constant 9 : index
    %65 = vector.load %arg0[%c0_14, %c9] : memref<16x10xi32, #tpu.memory_space<vmem>>, vector<16x1xi32>
    %66 = vector.broadcast %64 : vector<16x1xi32> to vector<16x64xi32>
    %67 = arith.cmpi eq, %63, %66 : vector<16x64xi32>
    %68 = arith.extui %67 : vector<16x64xi1> to vector<16x64xi32>
    %69 = arith.sitofp %68 : vector<16x64xi32> to vector<16x64xf32>
    %70 = arith.truncf %69 : vector<16x64xf32> to vector<16x64xbf16>
    %71 = vector.broadcast %65 : vector<16x1xi32> to vector<16x64xi32>
    %72 = arith.cmpi eq, %63, %71 : vector<16x64xi32>
    %73 = arith.extui %72 : vector<16x64xi1> to vector<16x64xi32>
    %74 = arith.sitofp %73 : vector<16x64xi32> to vector<16x64xf32>
    %75 = arith.truncf %74 : vector<16x64xf32> to vector<16x64xbf16>
    %76 = arith.addf %70, %75 : vector<16x64xbf16>
    %c0_15 = arith.constant 0 : index
    %c0_16 = arith.constant 0 : index
    %77 = vector.load %arg3[%c0_15, %c0_16] : memref<64x128xbf16, #tpu.memory_space<vmem>>, vector<64x128xbf16>
    %cst_17 = arith.constant dense<0.000000e+00> : vector<16x128xf32>
    %78 = tpu.matmul %76, %77, %cst_17 {dimension_numbers = #tpu.dot_dimension_numbers<[1], [0], [0], [1], [0, 0, 1, 1], [], []>} : vector<16x64xbf16>, vector<64x128xbf16>, vector<16x128xf32> -> vector<16x128xf32>
    %79 = arith.addf %62, %78 : vector<16x128xf32>
    %cst_18 = arith.constant 0.000000e+00 : f32
    %80 = vector.broadcast %cst_18 : f32 to vector<16x128xf32>
    %81 = arith.maximumf %79, %80 : vector<16x128xf32>
    %82 = vector.shape_cast %81 : vector<16x128xf32> to vector<4x4x128xf32>
    %cst_19 = arith.constant dense<0.000000e+00> : vector<4x128xf32>
    %83 = vector.multi_reduction <add>, %82, %cst_19 [1] : vector<4x4x128xf32> to vector<4x128xf32>
    %84 = arith.truncf %83 : vector<4x128xf32> to vector<4x128xbf16>
    %c0_20 = arith.constant 0 : index
    %c0_21 = arith.constant 0 : index
    %85 = vector.load %arg4[%c0_20, %c0_21] : memref<128x128xbf16, #tpu.memory_space<vmem>>, vector<128x128xbf16>
    %cst_22 = arith.constant dense<0.000000e+00> : vector<4x128xf32>
    %86 = tpu.matmul %84, %85, %cst_22 {dimension_numbers = #tpu.dot_dimension_numbers<[1], [0], [0], [1], [0, 0, 1, 1], [], []>} : vector<4x128xbf16>, vector<128x128xbf16>, vector<4x128xf32> -> vector<4x128xf32>
    %c0_23 = arith.constant 0 : index
    %c0_24 = arith.constant 0 : index
    %87 = vector.load %arg5[%c0_23, %c0_24] : memref<1x128xf32, #tpu.memory_space<vmem>>, vector<1x128xf32>
    %88 = vector.broadcast %87 : vector<1x128xf32> to vector<4x128xf32>
    %89 = arith.addf %86, %88 : vector<4x128xf32>
    %c0_25 = arith.constant 0 : index
    %c0_26 = arith.constant 0 : index
    %90 = vector.load %arg6[%c0_25, %c0_26] : memref<4x128xf32, #tpu.memory_space<vmem>>, vector<4x128xf32>
    %91 = arith.addf %90, %89 : vector<4x128xf32>
    %c0_27 = arith.constant 0 : index
    %c0_28 = arith.constant 0 : index
    %92 = vector.load %arg7[%c0_27, %c0_28] : memref<8x128xf32, #tpu.memory_space<vmem>>, vector<4x128xf32>
    tpu.vector_store %arg7[%c0_27, %c0_28], %91 {strides = array<i32>} : memref<8x128xf32, #tpu.memory_space<vmem>>, vector<4x128xf32>,
    %c4_29 = arith.constant 4 : index
    %c0_30 = arith.constant 0 : index
    %93 = vector.load %arg7[%c4_29, %c0_30] : memref<8x128xf32, #tpu.memory_space<vmem>>, vector<4x128xf32>
    tpu.vector_store %arg7[%c4_29, %c0_30], %89 {strides = array<i32>} : memref<8x128xf32, #tpu.memory_space<vmem>>, vector<4x128xf32>,
    return
  }
}

</mosaic_0001>

<llo_original>
// kernel: tpu_custom_call.1
$region0: #{tpu_custom_call.1}
  #allocation0 [shape = 'u32[]', space=smem, size = 0x4, offset = 0x4, fixed_abs, tag = 'smem constant byte address 0x4 - core index']
  #allocation1 [shape = 'u32[144,128]{1,0:T(1,128)}', space=vmem, size = 0x12000, scoped, tag = 'internal scratch']
  %s0 = inlined_call_operand.hbm [shape: s32[16,10], index: 0, kind: input, shape index: {}]
  %s1 = inlined_call_operand.hbm [shape: bf16[256,128], index: 1, kind: input, shape index: {}]
  %s2 = inlined_call_operand.vmem [shape: f32[1,128], index: 2, kind: input, shape index: {}]
  %s3 = inlined_call_operand.hbm [shape: bf16[64,128], index: 3, kind: input, shape index: {}]
  %s4 = inlined_call_operand.hbm [shape: bf16[128,128], index: 4, kind: input, shape index: {}]
  %s5 = inlined_call_operand.vmem [shape: f32[1,128], index: 5, kind: input, shape index: {}]
  %s6 = inlined_call_operand.vmem [shape: f32[4,128], index: 6, kind: input, shape index: {}]
  %s7 = inlined_call_operand.hbm [shape: f32[8,128], index: 7, kind: output, shape index: {}]
  %s8 = sld [smem:[#allocation0]]
  $region54: #{tpu_custom_call.1} parent=0
    _
  %s10 = ssub.s32 1, %s8
  %s11 = scalar_select 0, %s10, %s8
  $region1: #{tpu_custom_call.1} parent=0
    #allocation2 [shape = 'u8[8192]{0}', space=vmem, size = 0x2000, scoped, tag = 'input window, operand 0, single buffered']
    #allocation3 [shape = 's32[1]{0}', space=sflag, size = 0x4, scoped, tag = 'scoped memory for tpu_custom_call.1']
    #allocation4 [shape = 's32[1]{0}', space=sflag, size = 0x4, scoped, tag = 'scoped memory for tpu_custom_call.1']
    #allocation5 [shape = 'u8[65536]{0}', space=vmem, size = 0x10000, scoped, tag = 'input window, operand 1, single buffered']
    #allocation6 [shape = 's32[1]{0}', space=sflag, size = 0x4, scoped, tag = 'scoped memory for tpu_custom_call.1']
    #allocation7 [shape = 'u8[16384]{0}', space=vmem, size = 0x4000, scoped, tag = 'input window, operand 3, single buffered']
    #allocation8 [shape = 'u8[32768]{0}', space=vmem, size = 0x8000, scoped, tag = 'input window, operand 4, single buffered']
    #allocation9 [shape = 's32[1]{0}', space=sflag, size = 0x4, scoped, tag = 'scoped memory for tpu_custom_call.1']
    #allocation10 [shape = 'u8[4096]{0}', space=vmem, size = 0x1000, scoped, tag = 'output window, operand 0, single buffered']
    %12 = vsyncpa [#allocation3], 0
    %13 = vsyncpa [#allocation6], 0
    %14 = vsyncpa [#allocation9], 0
    %15 = vsyncpa [#allocation4], 0
    // Predicated region
    $region2: #{tpu_custom_call.1} parent=1 // pred_check
      _
    $region3: #{tpu_custom_call.1} parent=1 // pred_check_branch
      %17 = sbr.rel (0) target = $region5
    $region4: #{tpu_custom_call.1} parent=1 // pred_region
      %s19 = ssub.s32 256, 256
      %20 = vsyncadd [#allocation3], %s19
      %s21 = sshll.u32 [#allocation2], 4
      %s22 = int_to_ptr.vmem [resolvable:$true] %s21
      %27 = dma.hbm_to_vmem [thread:$0]  %s0, 256, %s22, [#allocation3], 128, 128, 8
    $region5: #{tpu_custom_call.1} parent=1 // pred_fallthru
      _
    // Predicated region
    $region6: #{tpu_custom_call.1} parent=1 // pred_check
      _
    $region7: #{tpu_custom_call.1} parent=1 // pred_check_branch
      %29 = sbr.rel (0) target = $region9
    $region8: #{tpu_custom_call.1} parent=1 // pred_region
      %s31 = ssub.s32 2048, 2048
      %32 = vsyncadd [#allocation6], %s31
      %s33 = sshll.u32 [#allocation5], 4
      %s34 = int_to_ptr.vmem [resolvable:$true] %s33
      %39 = dma.hbm_to_vmem [thread:$0]  %s1, 2048, %s34, [#allocation6], 64, 64, 4
    $region9: #{tpu_custom_call.1} parent=1 // pred_fallthru
      _
    // Predicated region
    $region10: #{tpu_custom_call.1} parent=1 // pred_check
      _
    $region11: #{tpu_custom_call.1} parent=1 // pred_check_branch
      %41 = sbr.rel (0) target = $region13
    $region12: #{tpu_custom_call.1} parent=1 // pred_region
      _
    $region13: #{tpu_custom_call.1} parent=1 // pred_fallthru
      _
    // Predicated region
    $region14: #{tpu_custom_call.1} parent=1 // pred_check
      _
    $region15: #{tpu_custom_call.1} parent=1 // pred_check_branch
      %43 = sbr.rel (0) target = $region17
    $region16: #{tpu_custom_call.1} parent=1 // pred_region
      %s45 = ssub.s32 512, 512
      %46 = vsyncadd [#allocation6], %s45
      %s47 = sshll.u32 [#allocation7], 4
      %s48 = int_to_ptr.vmem [resolvable:$true] %s47
      %53 = dma.hbm_to_vmem [thread:$0]  %s3, 512, %s48, [#allocation6], 64, 64, 4
    $region17: #{tpu_custom_call.1} parent=1 // pred_fallthru
      _
    // Predicated region
    $region18: #{tpu_custom_call.1} parent=1 // pred_check
      _
    $region19: #{tpu_custom_call.1} parent=1 // pred_check_branch
      %55 = sbr.rel (0) target = $region21
    $region20: #{tpu_custom_call.1} parent=1 // pred_region
      %s57 = ssub.s32 1024, 1024
      %58 = vsyncadd [#allocation9], %s57
      %s59 = sshll.u32 [#allocation8], 4
      %s60 = int_to_ptr.vmem [resolvable:$true] %s59
      %65 = dma.hbm_to_vmem [thread:$0]  %s4, 1024, %s60, [#allocation9], 64, 64, 4
    $region21: #{tpu_custom_call.1} parent=1 // pred_fallthru
      _
    // Predicated region
    $region22: #{tpu_custom_call.1} parent=1 // pred_check
      _
    $region23: #{tpu_custom_call.1} parent=1 // pred_check_branch
      %67 = sbr.rel (0) target = $region25
    $region24: #{tpu_custom_call.1} parent=1 // pred_region
      _
    $region25: #{tpu_custom_call.1} parent=1 // pred_fallthru
      _
    // Predicated region
    $region26: #{tpu_custom_call.1} parent=1 // pred_check
      _
    $region27: #{tpu_custom_call.1} parent=1 // pred_check_branch
      %69 = sbr.rel (0) target = $region29
    $region28: #{tpu_custom_call.1} parent=1 // pred_region
      _
    $region29: #{tpu_custom_call.1} parent=1 // pred_fallthru
      _
    // Predicated region
    $region30: #{tpu_custom_call.1} parent=1 // pred_check
      _
    $region31: #{tpu_custom_call.1} parent=1 // pred_check_branch
      %71 = sbr.rel (0) target = $region33
    $region32: #{tpu_custom_call.1} parent=1 // pred_region
      %72 = dma.done [#allocation3], 256
    $region33: #{tpu_custom_call.1} parent=1 // pred_fallthru
      _
    // Predicated region
    $region34: #{tpu_custom_call.1} parent=1 // pred_check
      _
    $region35: #{tpu_custom_call.1} parent=1 // pred_check_branch
      %74 = sbr.rel (0) target = $region37
    $region36: #{tpu_custom_call.1} parent=1 // pred_region
      %75 = dma.done [#allocation6], 2048
    $region37: #{tpu_custom_call.1} parent=1 // pred_fallthru
      _
    // Predicated region
    $region38: #{tpu_custom_call.1} parent=1 // pred_check
      _
    $region39: #{tpu_custom_call.1} parent=1 // pred_check_branch
      %77 = sbr.rel (0) target = $region41
    $region40: #{tpu_custom_call.1} parent=1 // pred_region
      %78 = dma.done [#allocation6], 512
    $region41: #{tpu_custom_call.1} parent=1 // pred_fallthru
      _
    // Predicated region
    $region42: #{tpu_custom_call.1} parent=1 // pred_check
      _
    $region43: #{tpu_custom_call.1} parent=1 // pred_check_branch
      %80 = sbr.rel (0) target = $region45
    $region44: #{tpu_custom_call.1} parent=1 // pred_region
      %81 = dma.done [#allocation9], 1024
    $region45: #{tpu_custom_call.1} parent=1 // pred_fallthru
      _
    %v83 = vlaneseq
    %v84 = vand.u32 %v83, 127
    %v85 = vadd.s32 %v84, 128
    %v86 = vld [vmem:[#allocation2] sm:$0xff]
    %v87 = vld [vmem:[#allocation2 + $0x8] sm:$0xff]
    %88 = vset.pattern.permute.xlu0 0
    %89 = vperm.xlu0 %88, %v86
    %v90 = vpop.permute.xlu0 %89
    %91 = vset.pattern.permute.xlu0 0
    %92 = vperm.xlu0 %91, %v87
    %v93 = vpop.permute.xlu0 %92
    %vm94 = vcmp.eq.s32.totalorder %v84, %v90
    %vm95 = vcmp.eq.s32.totalorder %v85, %v90
    %vm96 = vcmp.eq.s32.totalorder %v84, %v93
    %vm97 = vcmp.eq.s32.totalorder %v85, %v93
    %v98 = vsel %vm94, 1, 0
    %v99 = vsel %vm95, 1, 0
    %v100 = vsel %vm96, 1, 0
    %v101 = vsel %vm97, 1, 0
    %v102 = vcvt.s32.f32 %v98
    %v103 = vcvt.s32.f32 %v99
    %v104 = vcvt.s32.f32 %v100
    %v105 = vcvt.s32.f32 %v101
    %v106 = vpack.c.bf16 %v104, %v102
    %v107 = vpack.c.bf16 %v105, %v103
    %108 = vset.pattern.permute.xlu0 1
    %109 = vperm.xlu0 %108, %v86
    %v110 = vpop.permute.xlu0 %109
    %111 = vset.pattern.permute.xlu0 1
    %112 = vperm.xlu0 %111, %v87
    %v113 = vpop.permute.xlu0 %112
    %vm114 = vcmp.eq.s32.totalorder %v84, %v110
    %vm115 = vcmp.eq.s32.totalorder %v85, %v110
    %vm116 = vcmp.eq.s32.totalorder %v84, %v113
    %vm117 = vcmp.eq.s32.totalorder %v85, %v113
    %v118 = vsel %vm114, 1, 0
    %v119 = vsel %vm115, 1, 0
    %v120 = vsel %vm116, 1, 0
    %v121 = vsel %vm117, 1, 0
    %v122 = vcvt.s32.f32 %v118
    %v123 = vcvt.s32.f32 %v119
    %v124 = vcvt.s32.f32 %v120
    %v125 = vcvt.s32.f32 %v121
    %v126 = vpack.c.bf16 %v124, %v122
    %v127 = vpack.c.bf16 %v125, %v123
    %v128 = vadd.bf16 %v106, %v126
    %v129 = vadd.bf16 %v107, %v127
    %130 = vset.pattern.permute.xlu0 2
    %131 = vperm.xlu0 %130, %v86
    %v132 = vpop.permute.xlu0 %131
    %133 = vset.pattern.permute.xlu0 2
    %134 = vperm.xlu0 %133, %v87
    %v135 = vpop.permute.xlu0 %134
    %vm136 = vcmp.eq.s32.totalorder %v84, %v132
    %vm137 = vcmp.eq.s32.totalorder %v85, %v132
    %vm138 = vcmp.eq.s32.totalorder %v84, %v135
    %vm139 = vcmp.eq.s32.totalorder %v85, %v135
    %v140 = vsel %vm136, 1, 0
    %v141 = vsel %vm137, 1, 0
    %v142 = vsel %vm138, 1, 0
    %v143 = vsel %vm139, 1, 0
    %v144 = vcvt.s32.f32 %v140
    %v145 = vcvt.s32.f32 %v141
    %v146 = vcvt.s32.f32 %v142
    %v147 = vcvt.s32.f32 %v143
    %v148 = vpack.c.bf16 %v146, %v144
    %v149 = vpack.c.bf16 %v147, %v145
    %v150 = vadd.bf16 %v128, %v148
    %v151 = vadd.bf16 %v129, %v149
    %152 = vset.pattern.permute.xlu0 3
    %153 = vperm.xlu0 %152, %v86
    %v154 = vpop.permute.xlu0 %153
    %155 = vset.pattern.permute.xlu0 3
    %156 = vperm.xlu0 %155, %v87
    %v157 = vpop.permute.xlu0 %156
    %vm158 = vcmp.eq.s32.totalorder %v84, %v154
    %vm159 = vcmp.eq.s32.totalorder %v85, %v154
    %vm160 = vcmp.eq.s32.totalorder %v84, %v157
    %vm161 = vcmp.eq.s32.totalorder %v85, %v157
    %v162 = vsel %vm158, 1, 0
    %v163 = vsel %vm159, 1, 0
    %v164 = vsel %vm160, 1, 0
    %v165 = vsel %vm161, 1, 0
    %v166 = vcvt.s32.f32 %v162
    %v167 = vcvt.s32.f32 %v163
    %v168 = vcvt.s32.f32 %v164
    %v169 = vcvt.s32.f32 %v165
    %v170 = vpack.c.bf16 %v168, %v166
    %v171 = vpack.c.bf16 %v169, %v167
    %v172 = vadd.bf16 %v150, %v170
    %v173 = vadd.bf16 %v151, %v171
    %174 = vset.pattern.permute.xlu0 4
    %175 = vperm.xlu0 %174, %v86
    %v176 = vpop.permute.xlu0 %175
    %177 = vset.pattern.permute.xlu0 4
    %178 = vperm.xlu0 %177, %v87
    %v179 = vpop.permute.xlu0 %178
    %vm180 = vcmp.eq.s32.totalorder %v84, %v176
    %vm181 = vcmp.eq.s32.totalorder %v85, %v176
    %vm182 = vcmp.eq.s32.totalorder %v84, %v179
    %vm183 = vcmp.eq.s32.totalorder %v85, %v179
    %v184 = vsel %vm180, 1, 0
    %v185 = vsel %vm181, 1, 0
    %v186 = vsel %vm182, 1, 0
    %v187 = vsel %vm183, 1, 0
    %v188 = vcvt.s32.f32 %v184
    %v189 = vcvt.s32.f32 %v185
    %v190 = vcvt.s32.f32 %v186
    %v191 = vcvt.s32.f32 %v187
    %v192 = vpack.c.bf16 %v190, %v188
    %v193 = vpack.c.bf16 %v191, %v189
    %v194 = vadd.bf16 %v172, %v192
    %v195 = vadd.bf16 %v173, %v193
    %196 = vset.pattern.permute.xlu0 5
    %197 = vperm.xlu0 %196, %v86
    %v198 = vpop.permute.xlu0 %197
    %199 = vset.pattern.permute.xlu0 5
    %200 = vperm.xlu0 %199, %v87
    %v201 = vpop.permute.xlu0 %200
    %vm202 = vcmp.eq.s32.totalorder %v84, %v198
    %vm203 = vcmp.eq.s32.totalorder %v85, %v198
    %vm204 = vcmp.eq.s32.totalorder %v84, %v201
    %vm205 = vcmp.eq.s32.totalorder %v85, %v201
    %v206 = vsel %vm202, 1, 0
    %v207 = vsel %vm203, 1, 0
    %v208 = vsel %vm204, 1, 0
    %v209 = vsel %vm205, 1, 0
    %v210 = vcvt.s32.f32 %v206
    %v211 = vcvt.s32.f32 %v207
    %v212 = vcvt.s32.f32 %v208
    %v213 = vcvt.s32.f32 %v209
    %v214 = vpack.c.bf16 %v212, %v210
    %v215 = vpack.c.bf16 %v213, %v211
    %v216 = vadd.bf16 %v194, %v214
    %v217 = vadd.bf16 %v195, %v215
    %218 = vset.pattern.permute.xlu0 6
    %219 = vperm.xlu0 %218, %v86
    %v220 = vpop.permute.xlu0 %219
    %221 = vset.pattern.permute.xlu0 6
    %222 = vperm.xlu0 %221, %v87
    %v223 = vpop.permute.xlu0 %222
    %vm224 = vcmp.eq.s32.totalorder %v84, %v220
    %vm225 = vcmp.eq.s32.totalorder %v85, %v220
    %vm226 = vcmp.eq.s32.totalorder %v84, %v223
    %vm227 = vcmp.eq.s32.totalorder %v85, %v223
    %v228 = vsel %vm224, 1, 0
    %v229 = vsel %vm225, 1, 0
    %v230 = vsel %vm226, 1, 0
    %v231 = vsel %vm227, 1, 0
    %v232 = vcvt.s32.f32 %v228
    %v233 = vcvt.s32.f32 %v229
    %v234 = vcvt.s32.f32 %v230
    %v235 = vcvt.s32.f32 %v231
    %v236 = vpack.c.bf16 %v234, %v232
    %v237 = vpack.c.bf16 %v235, %v233
    %v238 = vadd.bf16 %v216, %v236
    %v239 = vadd.bf16 %v217, %v237
    %240 = vset.pattern.permute.xlu0 7
    %241 = vperm.xlu0 %240, %v86
    %v242 = vpop.permute.xlu0 %241
    %243 = vset.pattern.permute.xlu0 7
    %244 = vperm.xlu0 %243, %v87
    %v245 = vpop.permute.xlu0 %244
    %vm246 = vcmp.eq.s32.totalorder %v84, %v242
    %vm247 = vcmp.eq.s32.totalorder %v85, %v242
    %vm248 = vcmp.eq.s32.totalorder %v84, %v245
    %vm249 = vcmp.eq.s32.totalorder %v85, %v245
    %v250 = vsel %vm246, 1, 0
    %v251 = vsel %vm247, 1, 0
    %v252 = vsel %vm248, 1, 0
    %v253 = vsel %vm249, 1, 0
    %v254 = vcvt.s32.f32 %v250
    %v255 = vcvt.s32.f32 %v251
    %v256 = vcvt.s32.f32 %v252
    %v257 = vcvt.s32.f32 %v253
    %v258 = vpack.c.bf16 %v256, %v254
    %v259 = vpack.c.bf16 %v257, %v255
    %v260 = vadd.bf16 %v238, %v258
    %v261 = vadd.bf16 %v239, %v259
    %v262 = vld [vmem:[#allocation5] sm:$0xf]
    %v263 = vld [vmem:[#allocation5 + $0x4] sm:$0xf]
    %v264 = vld [vmem:[#allocation5 + $0x8] sm:$0xf]
    %v265 = vld [vmem:[#allocation5 + $0xc] sm:$0xf]
    %v266 = vld [vmem:[#allocation5 + $0x10] sm:$0xf]
    %v267 = vld [vmem:[#allocation5 + $0x14] sm:$0xf]
    %v268 = vld [vmem:[#allocation5 + $0x18] sm:$0xf]
    %v269 = vld [vmem:[#allocation5 + $0x1c] sm:$0xf]
    %v270 = vld [vmem:[#allocation5 + $0x20] sm:$0xf]
    %v271 = vld [vmem:[#allocation5 + $0x24] sm:$0xf]
    %v272 = vld [vmem:[#allocation5 + $0x28] sm:$0xf]
    %v273 = vld [vmem:[#allocation5 + $0x2c] sm:$0xf]
    %v274 = vld [vmem:[#allocation5 + $0x30] sm:$0xf]
    %v275 = vld [vmem:[#allocation5 + $0x34] sm:$0xf]
    %v276 = vld [vmem:[#allocation5 + $0x38] sm:$0xf]
    %v277 = vld [vmem:[#allocation5 + $0x3c] sm:$0xf]
    %v278 = vld [vmem:[#allocation5 + $0x40] sm:$0xf]
    %v279 = vld [vmem:[#allocation5 + $0x44] sm:$0xf]
    %v280 = vld [vmem:[#allocation5 + $0x48] sm:$0xf]
    %v281 = vld [vmem:[#allocation5 + $0x4c] sm:$0xf]
    %v282 = vld [vmem:[#allocation5 + $0x50] sm:$0xf]
    %v283 = vld [vmem:[#allocation5 + $0x54] sm:$0xf]
    %v284 = vld [vmem:[#allocation5 + $0x58] sm:$0xf]
    %v285 = vld [vmem:[#allocation5 + $0x5c] sm:$0xf]
    %v286 = vld [vmem:[#allocation5 + $0x60] sm:$0xf]
    %v287 = vld [vmem:[#allocation5 + $0x64] sm:$0xf]
    %v288 = vld [vmem:[#allocation5 + $0x68] sm:$0xf]
    %v289 = vld [vmem:[#allocation5 + $0x6c] sm:$0xf]
    %v290 = vld [vmem:[#allocation5 + $0x70] sm:$0xf]
    %v291 = vld [vmem:[#allocation5 + $0x74] sm:$0xf]
    %v292 = vld [vmem:[#allocation5 + $0x78] sm:$0xf]
    %v293 = vld [vmem:[#allocation5 + $0x7c] sm:$0xf]
    %v326 = vunpack.c.l.b16 %v262
    %v327 = vunpack.c.l.b16 %v263
    %v328 = vunpack.c.l.b16 %v264
    %v329 = vunpack.c.l.b16 %v265
    %v330 = vunpack.c.l.b16 %v266
    %v331 = vunpack.c.l.b16 %v267
    %v332 = vunpack.c.l.b16 %v268
    %v333 = vunpack.c.l.b16 %v269
    %v334 = vunpack.c.l.b16 %v270
    %v335 = vunpack.c.l.b16 %v271
    %v336 = vunpack.c.l.b16 %v272
    %v337 = vunpack.c.l.b16 %v273
    %v338 = vunpack.c.l.b16 %v274
    %v339 = vunpack.c.l.b16 %v275
    %v340 = vunpack.c.l.b16 %v276
    %v341 = vunpack.c.l.b16 %v277
    %v342 = vunpack.c.l.b16 %v278
    %v343 = vunpack.c.l.b16 %v279
    %v344 = vunpack.c.l.b16 %v280
    %v345 = vunpack.c.l.b16 %v281
    %v346 = vunpack.c.l.b16 %v282
    %v347 = vunpack.c.l.b16 %v283
    %v348 = vunpack.c.l.b16 %v284
    %v349 = vunpack.c.l.b16 %v285
    %v350 = vunpack.c.l.b16 %v286
    %v351 = vunpack.c.l.b16 %v287
    %v352 = vunpack.c.l.b16 %v288
    %v353 = vunpack.c.l.b16 %v289
    %v354 = vunpack.c.l.b16 %v290
    %v355 = vunpack.c.l.b16 %v291
    %v356 = vunpack.c.l.b16 %v292
    %v357 = vunpack.c.l.b16 %v293
    %v358 = vpack.c.b16 %v327, %v326
    %v359 = vpack.c.b16 %v329, %v328
    %v360 = vpack.c.b16 %v331, %v330
    %v361 = vpack.c.b16 %v333, %v332
    %v362 = vpack.c.b16 %v335, %v334
    %v363 = vpack.c.b16 %v337, %v336
    %v364 = vpack.c.b16 %v339, %v338
    %v365 = vpack.c.b16 %v341, %v340
    %v366 = vpack.c.b16 %v343, %v342
    %v367 = vpack.c.b16 %v345, %v344
    %v368 = vpack.c.b16 %v347, %v346
    %v369 = vpack.c.b16 %v349, %v348
    %v370 = vpack.c.b16 %v351, %v350
    %v371 = vpack.c.b16 %v353, %v352
    %v372 = vpack.c.b16 %v355, %v354
    %v373 = vpack.c.b16 %v357, %v356
    %390 = vmatprep.subr.bf16.mxu0 0
    %391 = vmatpush1.bf16.msra.mxu0 %v358
    %392 = vmatprep.subr.bf16.mxu0 0
    %393 = vmatpush1.bf16.msra.mxu0 %v359
    %394 = vmatprep.subr.bf16.mxu0 0
    %395 = vmatpush1.bf16.msra.mxu0 %v360
    %396 = vmatprep.subr.bf16.mxu0 0
    %397 = vmatpush1.bf16.msra.mxu0 %v361
    %398 = vmatprep.subr.bf16.mxu0 0
    %399 = vmatpush1.bf16.msra.mxu0 %v362
    %400 = vmatprep.subr.bf16.mxu0 0
    %401 = vmatpush1.bf16.msra.mxu0 %v363
    %402 = vmatprep.subr.bf16.mxu0 0
    %403 = vmatpush1.bf16.msra.mxu0 %v364
    %404 = vmatprep.subr.bf16.mxu0 0
    %405 = vmatpush1.bf16.msra.mxu0 %v365
    %406 = vmatprep.subr.bf16.mxu0 0
    %407 = vmatpush1.bf16.msra.mxu0 %v366
    %408 = vmatprep.subr.bf16.mxu0 0
    %409 = vmatpush1.bf16.msra.mxu0 %v367
    %410 = vmatprep.subr.bf16.mxu0 0
    %411 = vmatpush1.bf16.msra.mxu0 %v368
    %412 = vmatprep.subr.bf16.mxu0 0
    %413 = vmatpush1.bf16.msra.mxu0 %v369
    %414 = vmatprep.subr.bf16.mxu0 0
    %415 = vmatpush1.bf16.msra.mxu0 %v370
    %416 = vmatprep.subr.bf16.mxu0 0
    %417 = vmatpush1.bf16.msra.mxu0 %v371
    %418 = vmatprep.subr.bf16.mxu0 0
    %419 = vmatpush1.bf16.msra.mxu0 %v372
    %420 = vmatprep.subr.bf16.mxu0 0
    %421 = vmatpush1.bf16.msra.mxu0 %v373
    %422 = vmatprep.mubr.bf16.mxu0 %v261
    %423 = vmatmul.mubr.bf16.gmra.mrb[0].mxu0 %v260
    %v424 = vpop.f32.mrb[0].mxu0
    %v425 = vadd.f32 0.0, %v424
    %v426 = vpop.f32.mrb[0].mxu0
    %v427 = vpop.f32.mrb[0].mxu0
    %v428 = vadd.f32 0.0, %v427
    %v429 = vpop.f32.mrb[0].mxu0
    %430 = vdwg.mxu0
    %v431 = vmul.f32 %v425, 0.125
    %v432 = vmul.f32 %v428, 0.125
    %v433 = vld [vmem:[%s2] sm:$0x1]
    %v435 = vlaneseq
    %v436 = vshrl.u32 %v435, 7
    %v437 = vsub.s32 0, %v436
    %v438 = vrot.slane %v433, %v437
    %v440 = vadd.f32 %v431, %v438
    %v441 = vadd.f32 %v432, %v438
    %442 = vset.pattern.permute.xlu0 8
    %443 = vperm.xlu0 %442, %v86
    %v444 = vpop.permute.xlu0 %443
    %445 = vset.pattern.permute.xlu0 8
    %446 = vperm.xlu0 %445, %v87
    %v447 = vpop.permute.xlu0 %446
    %vm448 = vcmp.eq.s32.totalorder %v84, %v444
    %vm449 = vcmp.eq.s32.totalorder %v84, %v447
    %v450 = vsel %vm448, 1, 0
    %v451 = vsel %vm449, 1, 0
    %v452 = vcvt.s32.f32 %v450
    %v453 = vcvt.s32.f32 %v451
    %v454 = vpack.c.bf16 %v453, %v452
    %455 = vset.pattern.permute.xlu0 9
    %456 = vperm.xlu0 %455, %v86
    %v457 = vpop.permute.xlu0 %456
    %458 = vset.pattern.permute.xlu0 9
    %459 = vperm.xlu0 %458, %v87
    %v460 = vpop.permute.xlu0 %459
    %vm461 = vcmp.eq.s32.totalorder %v84, %v457
    %vm462 = vcmp.eq.s32.totalorder %v84, %v460
    %v463 = vsel %vm461, 1, 0
    %v464 = vsel %vm462, 1, 0
    %v465 = vcvt.s32.f32 %v463
    %v466 = vcvt.s32.f32 %v464
    %v467 = vpack.c.bf16 %v466, %v465
    %v468 = vadd.bf16 %v454, %v467
    %v469 = vld [vmem:[#allocation7] sm:$0xf]
    %v470 = vld [vmem:[#allocation7 + $0x4] sm:$0xf]
    %v471 = vld [vmem:[#allocation7 + $0x8] sm:$0xf]
    %v472 = vld [vmem:[#allocation7 + $0xc] sm:$0xf]
    %v473 = vld [vmem:[#allocation7 + $0x10] sm:$0xf]
    %v474 = vld [vmem:[#allocation7 + $0x14] sm:$0xf]
    %v475 = vld [vmem:[#allocation7 + $0x18] sm:$0xf]
    %v476 = vld [vmem:[#allocation7 + $0x1c] sm:$0xf]
    %v485 = vunpack.c.l.b16 %v469
    %v486 = vunpack.c.l.b16 %v470
    %v487 = vunpack.c.l.b16 %v471
    %v488 = vunpack.c.l.b16 %v472
    %v489 = vunpack.c.l.b16 %v473
    %v490 = vunpack.c.l.b16 %v474
    %v491 = vunpack.c.l.b16 %v475
    %v492 = vunpack.c.l.b16 %v476
    %v493 = vpack.c.b16 %v486, %v485
    %v494 = vpack.c.b16 %v488, %v487
    %v495 = vpack.c.b16 %v490, %v489
    %v496 = vpack.c.b16 %v492, %v491
    %vm501 = vcmask 523264
    %v503 = vsel %vm501, %v468, 0
    %505 = vmatprep.subr.bf16.mxu0 0
    %506 = vmatpush1.bf16.msra.mxu0 %v493
    %507 = vmatprep.subr.bf16.mxu0 0
    %508 = vmatpush1.bf16.msra.mxu0 %v494
    %509 = vmatprep.subr.bf16.mxu0 0
    %510 = vmatpush1.bf16.msra.mxu0 %v495
    %511 = vmatprep.subr.bf16.mxu0 0
    %512 = vmatpush1.bf16.msra.mxu0 %v496
    %513 = vmatprep.subr.bf16.mxu0 0
    %514 = vmatpush1.bf16.msra.mxu0 0
    %515 = vmatprep.subr.bf16.mxu0 0
    %516 = vmatpush1.bf16.msra.mxu0 0
    %517 = vmatprep.subr.bf16.mxu0 0
    %518 = vmatpush1.bf16.msra.mxu0 0
    %519 = vmatprep.subr.bf16.mxu0 0
    %520 = vmatpush1.bf16.msra.mxu0 0
    %521 = vmatprep.subr.bf16.mxu0 0
    %522 = vmatpush1.bf16.msra.mxu0 0
    %523 = vmatprep.subr.bf16.mxu0 0
    %524 = vmatpush1.bf16.msra.mxu0 0
    %525 = vmatprep.subr.bf16.mxu0 0
    %526 = vmatpush1.bf16.msra.mxu0 0
    %527 = vmatprep.subr.bf16.mxu0 0
    %528 = vmatpush1.bf16.msra.mxu0 0
    %529 = vmatprep.subr.bf16.mxu0 0
    %530 = vmatpush1.bf16.msra.mxu0 0
    %531 = vmatprep.subr.bf16.mxu0 0
    %532 = vmatpush1.bf16.msra.mxu0 0
    %533 = vmatprep.subr.bf16.mxu0 0
    %534 = vmatpush1.bf16.msra.mxu0 0
    %535 = vmatprep.subr.bf16.mxu0 0
    %536 = vmatpush1.bf16.msra.mxu0 0
    %537 = vmatprep.mubr.bf16.mxu0 0
    %538 = vmatmul.mubr.bf16.gmra.mrb[0].mxu0 %v503
    %v539 = vpop.f32.mrb[0].mxu0
    %v540 = vadd.f32 0.0, %v539
    %v541 = vpop.f32.mrb[0].mxu0
    %v542 = vpop.f32.mrb[0].mxu0
    %v543 = vadd.f32 0.0, %v542
    %v544 = vpop.f32.mrb[0].mxu0
    %545 = vdwg.mxu0
    %v546 = vadd.f32 %v440, %v540
    %v547 = vadd.f32 %v441, %v543
    %v548 = vmax.f32 %v546, 0.0
    %v549 = vmax.f32 %v547, 0.0
    %v552 = vcombine.high %v548, %v548
    %v553 = vcombine.high %v549, %v549
    %vm556 = vcmask 1043456
    %v557 = vsel %vm556, %v548, 0.0
    %v558 = vrot.slane %v557, 4
    %v559 = vadd.f32 %v557, %v558
    %v560 = vrot.slane %v559, 2
    %v561 = vadd.f32 %v559, %v560
    %v562 = vrot.slane %v561, 1
    %v563 = vadd.f32 %v561, %v562
    %v564 = vsel %vm556, %v552, 0.0
    %v565 = vrot.slane %v564, 4
    %v566 = vadd.f32 %v564, %v565
    %v567 = vrot.slane %v566, 2
    %v568 = vadd.f32 %v566, %v567
    %v569 = vrot.slane %v568, 1
    %v570 = vadd.f32 %v568, %v569
    %v571 = vsel %vm556, %v549, 0.0
    %v572 = vrot.slane %v571, 4
    %v573 = vadd.f32 %v571, %v572
    %v574 = vrot.slane %v573, 2
    %v575 = vadd.f32 %v573, %v574
    %v576 = vrot.slane %v575, 1
    %v577 = vadd.f32 %v575, %v576
    %v578 = vsel %vm556, %v553, 0.0
    %v579 = vrot.slane %v578, 4
    %v580 = vadd.f32 %v578, %v579
    %v581 = vrot.slane %v580, 2
    %v582 = vadd.f32 %v580, %v581
    %v583 = vrot.slane %v582, 1
    %v584 = vadd.f32 %v582, %v583
    %v585 = vpack.c.bf16 %v563, %v563
    %v586 = vpack.c.bf16 %v570, %v570
    %v587 = vpack.c.bf16 %v577, %v577
    %v588 = vpack.c.bf16 %v584, %v584
    %v589 = vld [vmem:[#allocation8] sm:$0xf]
    %v590 = vld [vmem:[#allocation8 + $0x4] sm:$0xf]
    %v591 = vld [vmem:[#allocation8 + $0x8] sm:$0xf]
    %v592 = vld [vmem:[#allocation8 + $0xc] sm:$0xf]
    %v593 = vld [vmem:[#allocation8 + $0x10] sm:$0xf]
    %v594 = vld [vmem:[#allocation8 + $0x14] sm:$0xf]
    %v595 = vld [vmem:[#allocation8 + $0x18] sm:$0xf]
    %v596 = vld [vmem:[#allocation8 + $0x1c] sm:$0xf]
    %v597 = vld [vmem:[#allocation8 + $0x20] sm:$0xf]
    %v598 = vld [vmem:[#allocation8 + $0x24] sm:$0xf]
    %v599 = vld [vmem:[#allocation8 + $0x28] sm:$0xf]
    %v600 = vld [vmem:[#allocation8 + $0x2c] sm:$0xf]
    %v601 = vld [vmem:[#allocation8 + $0x30] sm:$0xf]
    %v602 = vld [vmem:[#allocation8 + $0x34] sm:$0xf]
    %v603 = vld [vmem:[#allocation8 + $0x38] sm:$0xf]
    %v604 = vld [vmem:[#allocation8 + $0x3c] sm:$0xf]
    %v605 = vld [vmem:[%s5] sm:$0x1]
    %v607 = vlaneseq
    %v608 = vshrl.u32 %v607, 7
    %v609 = vsub.s32 0, %v608
    %v610 = vrot.slane %v605, %v609
    %v616 = vunpack.c.l.b16 %v585
    %v617 = vunpack.c.l.b16 %v586
    %v618 = vunpack.c.l.b16 %v587
    %v619 = vunpack.c.l.b16 %v588
    %vm620 = vcmask 1041409
    %v621 = vsel %vm620, %v617, %v616
    %vm622 = vcmask 1042434
    %v623 = vsel %vm622, %v618, %v621
    %vm624 = vcmask 1043459
    %v625 = vsel %vm624, %v619, %v623
    %v626 = vpack.c.b16 %v625, %v625
    %v644 = vunpack.c.l.b16 %v589
    %v645 = vunpack.c.l.b16 %v590
    %v646 = vunpack.c.l.b16 %v591
    %v647 = vunpack.c.l.b16 %v592
    %v648 = vunpack.c.l.b16 %v593
    %v649 = vunpack.c.l.b16 %v594
    %v650 = vunpack.c.l.b16 %v595
    %v651 = vunpack.c.l.b16 %v596
    %v652 = vunpack.c.l.b16 %v597
    %v653 = vunpack.c.l.b16 %v598
    %v654 = vunpack.c.l.b16 %v599
    %v655 = vunpack.c.l.b16 %v600
    %v656 = vunpack.c.l.b16 %v601
    %v657 = vunpack.c.l.b16 %v602
    %v658 = vunpack.c.l.b16 %v603
    %v659 = vunpack.c.l.b16 %v604
    %v660 = vpack.c.b16 %v645, %v644
    %v661 = vpack.c.b16 %v647, %v646
    %v662 = vpack.c.b16 %v649, %v648
    %v663 = vpack.c.b16 %v651, %v650
    %v664 = vpack.c.b16 %v653, %v652
    %v665 = vpack.c.b16 %v655, %v654
    %v666 = vpack.c.b16 %v657, %v656
    %v667 = vpack.c.b16 %v659, %v658
    %676 = vmatprep.subr.bf16.mxu0 0
    %677 = vmatpush1.bf16.msra.mxu0 %v660
    %678 = vmatprep.subr.bf16.mxu0 0
    %679 = vmatpush1.bf16.msra.mxu0 %v661
    %680 = vmatprep.subr.bf16.mxu0 0
    %681 = vmatpush1.bf16.msra.mxu0 %v662
    %682 = vmatprep.subr.bf16.mxu0 0
    %683 = vmatpush1.bf16.msra.mxu0 %v663
    %684 = vmatprep.subr.bf16.mxu0 0
    %685 = vmatpush1.bf16.msra.mxu0 %v664
    %686 = vmatprep.subr.bf16.mxu0 0
    %687 = vmatpush1.bf16.msra.mxu0 %v665
    %688 = vmatprep.subr.bf16.mxu0 0
    %689 = vmatpush1.bf16.msra.mxu0 %v666
    %690 = vmatprep.subr.bf16.mxu0 0
    %691 = vmatpush1.bf16.msra.mxu0 %v667
    %692 = vmatprep.subr.bf16.mxu0 0
    %693 = vmatpush1.bf16.msra.mxu0 0
    %694 = vmatprep.subr.bf16.mxu0 0
    %695 = vmatpush1.bf16.msra.mxu0 0
    %696 = vmatprep.subr.bf16.mxu0 0
    %697 = vmatpush1.bf16.msra.mxu0 0
    %698 = vmatprep.subr.bf16.mxu0 0
    %699 = vmatpush1.bf16.msra.mxu0 0
    %700 = vmatprep.subr.bf16.mxu0 0
    %701 = vmatpush1.bf16.msra.mxu0 0
    %702 = vmatprep.subr.bf16.mxu0 0
    %703 = vmatpush1.bf16.msra.mxu0 0
    %704 = vmatprep.subr.bf16.mxu0 0
    %705 = vmatpush1.bf16.msra.mxu0 0
    %706 = vmatprep.subr.bf16.mxu0 0
    %707 = vmatpush1.bf16.msra.mxu0 0
    %708 = vmatprep.mubr.bf16.mxu0 0
    %709 = vmatmul.mubr.bf16.gmra.mrb[0].mxu0 %v626
    %v710 = vpop.f32.mrb[0].mxu0
    %v711 = vadd.f32 %v610, %v710
    %v712 = vpop.f32.mrb[0].mxu0
    %v713 = vpop.f32.mrb[0].mxu0
    %v714 = vpop.f32.mrb[0].mxu0
    %715 = vdwg.mxu0
    %v716 = vld [vmem:[%s6] sm:$0xf]
    %v717 = vadd.f32 %v716, %v711
    %718 = vst [vmem:[#allocation10] sm:$0xf] %v717
    %719 = vst [vmem:[#allocation10 + $0x4] sm:$0xf] %v711
    // Predicated region
    $region46: #{tpu_custom_call.1} parent=1 // pred_check
      _
    $region47: #{tpu_custom_call.1} parent=1 // pred_check_branch
      %721 = sbr.rel (0) target = $region49
    $region48: #{tpu_custom_call.1} parent=1 // pred_region
      %s723 = ssub.s32 128, 128
      %724 = vsyncadd [#allocation4], %s723
      %s726 = sshll.u32 [#allocation10], 4
      %s727 = int_to_ptr.vmem [resolvable:$true] %s726
      %729 = dma.vmem_to_hbm [thread:$0]  %s727, 128, %s7, [#allocation4]
    $region49: #{tpu_custom_call.1} parent=1 // pred_fallthru
      _
    // Predicated region
    $region50: #{tpu_custom_call.1} parent=1 // pred_check
      _
    $region51: #{tpu_custom_call.1} parent=1 // pred_check_branch
      %731 = sbr.rel (0) target = $region53
    $region52: #{tpu_custom_call.1} parent=1 // pred_region
      %732 = dma.done [#allocation4], 128
    $region53: #{tpu_custom_call.1} parent=1 // pred_fallthru
      _
    %733 = vsyncpa [#allocation3], 1
    %734 = vsyncpa [#allocation6], 1
    %735 = vsyncpa [#allocation9], 1
    %736 = vsyncpa [#allocation4], 1

</llo_original>
